<compile_context>
chip_gen: v5e
topology: v5e:2x2
jax: 0.10.0
libtpu: 0.0.40
codegen_flags: <defaults>
</compile_context>

<pallas_src>
import functools

import jax
import jax.numpy as jnp
from jax.experimental import pallas as pl
from jax.experimental.pallas import tpu as pltpu


def _round_up(n, m):
    return ((n + m - 1) // m) * m


def mlp_kernel(x_ref, w1_ref, b1_ref, w2_ref, b2_ref, w3_ref, b3_ref, o_ref):
    """One batch tile: three MXU matmuls (f32 accumulation) + VPU ReLUs."""
    cdt = w1_ref.dtype
    x = x_ref[...].astype(cdt)  # cast in-kernel: no extra wrapper pass over x

    h = jnp.dot(x, w1_ref[...], preferred_element_type=jnp.float32) + b1_ref[...]
    h = jnp.maximum(h, 0.0).astype(cdt)

    h = jnp.dot(h, w2_ref[...], preferred_element_type=jnp.float32) + b2_ref[...]
    h = jnp.maximum(h, 0.0).astype(cdt)

    h = jnp.dot(h, w3_ref[...], preferred_element_type=jnp.float32) + b3_ref[...]
    o_ref[...] = h.astype(o_ref.dtype)


@functools.partial(jax.jit, static_argnames=("compute_dtype", "block_b"))
def neural_net_forward(x, params, *, compute_dtype=jnp.bfloat16, block_b=512):
    """x: [B, input_size] float32.  params: dict of w1,b1,w2,b2,w3,b3 (f32).

    Returns [B, num_classes] float32, matching the PyTorch forward (bf16
    matmul operands / f32 accumulation when compute_dtype=bfloat16; pass
    compute_dtype=jnp.float32 for exact f32 semantics).
    """
    # Weights are tiny and DMA'd once (resident); casting them in the wrapper
    # is negligible.  Biases stay f32 and are added after f32 accumulation.
    w1 = params["w1"].astype(compute_dtype)
    w2 = params["w2"].astype(compute_dtype)
    w3 = params["w3"].astype(compute_dtype)
    b1 = params["b1"].astype(jnp.float32)
    b2 = params["b2"].astype(jnp.float32)
    b3 = params["b3"].astype(jnp.float32)

    B, in_f = x.shape
    hidden = w1.shape[1]
    num_classes = w3.shape[1]

    # Batch tile: multiple of 8 (sublane rule), as large as block_b allows.
    bb = max(8, min(block_b, B))
    bb = _round_up(bb, 8)
    # v7x has two TensorCores; make sure a "parallel" grid has >= 2 steps when
    # the batch is big enough to split.
    if pl.cdiv(B, bb) < 2 and B > 8:
        bb = _round_up(pl.cdiv(B, 2), 8)
    grid = (pl.cdiv(B, bb),)  # ragged last tile: OOB rows dropped on writeback

    resident = lambda shape: pl.BlockSpec(shape, lambda i: (0, 0))

    # Advisory roofline hint for XLA's scheduler around the custom call.
    flops = 2 * B * (in_f * hidden + hidden * hidden + hidden * num_classes)
    weight_bytes = (w1.size + w2.size + w3.size) * w1.dtype.itemsize \
        + (b1.size + b2.size + b3.size) * 4
    bytes_accessed = 4 * B * in_f + 4 * B * num_classes + weight_bytes
    cost = pl.CostEstimate(flops=flops, transcendentals=0,
                           bytes_accessed=bytes_accessed)

    out = pl.pallas_call(
        mlp_kernel,
        out_shape=jax.ShapeDtypeStruct((B, num_classes), jnp.float32),
        grid_spec=pl.GridSpec(
            grid=grid,
            in_specs=[
                # x: tiled on batch, unpadded (last dim == full array dim).
                pl.BlockSpec((bb, in_f), lambda i: (i, 0)),
                resident(w1.shape), resident(b1.shape),   # weights/biases:
                resident(w2.shape), resident(b2.shape),   #   VMEM-resident
                resident(w3.shape), resident(b3.shape),
            ],
            # Output: unpadded (bb, num_classes); last dim == full array dim.
            out_specs=pl.BlockSpec((bb, num_classes), lambda i: (i, 0)),
        ),
        compiler_params=pltpu.CompilerParams(
            dimension_semantics=("parallel",),   # shard batch across TCs (v7x)
            # Tiles are tiny even at block_b=2048; 32 MiB is safe on every
            # generation (<= v7x's 64 MiB physical VMEM, > v5e's 16 MiB default).
            vmem_limit_bytes=32 * 1024 * 1024,
        ),
        cost_estimate=cost,
    )(x, w1, b1, w2, b2, w3, b3)

    return out


def init_params(key, input_size, hidden_size, num_classes):
    """Deterministic init mimicking nn.Linear's uniform(-1/sqrt(fan_in), +)."""
    ks = jax.random.split(key, 6)

    def linear(kw, kb, fan_in, fan_out):
        bound = 1.0 / jnp.sqrt(fan_in)
        w = jax.random.uniform(kw, (fan_in, fan_out), jnp.float32, -bound, bound)
        b = jax.random.uniform(kb, (1, fan_out), jnp.float32, -bound, bound)
        return w, b

    w1, b1 = linear(ks[0], ks[1], input_size, hidden_size)
    w2, b2 = linear(ks[2], ks[3], hidden_size, hidden_size)
    w3, b3 = linear(ks[4], ks[5], hidden_size, num_classes)
    return {"w1": w1, "b1": b1, "w2": w2, "b2": b2, "w3": w3, "b3": b3}


def _ref_forward(x, params, compute_dtype):
    """Plain-JAX reference with the same operand dtypes as the kernel."""
    h = x
    for wk, bk, act in (("w1", "b1", True), ("w2", "b2", True), ("w3", "b3", False)):
        w = params[wk].astype(compute_dtype)
        h = jnp.dot(h.astype(compute_dtype), w,
                    preferred_element_type=jnp.float32) + params[bk]
        if act:
            h = jnp.maximum(h, 0.0)
    return h


if __name__ == "__main__":
    input_size, hidden_size, num_classes = 32, 32, 16

    key = jax.random.PRNGKey(0)
    k_x1, k_x2, k_p = jax.random.split(key, 3)
    params = init_params(k_p, input_size, hidden_size, num_classes)

    # Case 1: batch not a multiple of the tile -> ragged last tile and a
    # multi-step pipelined grid.
    x_big = jax.random.normal(k_x1, (200, input_size), jnp.float32)
    out_big = jax.block_until_ready(
        neural_net_forward(x_big, params, block_b=64))

    # Case 2: default (large) tile; batch gets split into 2 tiles for megacore.
    out_big_default = jax.block_until_ready(neural_net_forward(x_big, params))

    # Case 3: tiny batch (single grid step).
    x_small = jax.random.normal(k_x2, (8, input_size), jnp.float32)
    out_small = jax.block_until_ready(neural_net_forward(x_small, params))

    for x, out in ((x_big, out_big), (x_big, out_big_default), (x_small, out_small)):
        assert out.shape == (x.shape[0], num_classes)
        assert out.dtype == jnp.float32
        # Bit-compatible reference (same bf16 operand / f32 accumulation path).
        ref_bf16 = _ref_forward(x, params, jnp.bfloat16)
        assert jnp.allclose(out, ref_bf16, atol=1e-3, rtol=1e-3)
        # Loose check against the full-f32 PyTorch-equivalent math.
        ref_f32 = _ref_forward(x, params, jnp.float32)
        assert jnp.allclose(out, ref_f32, atol=5e-2, rtol=5e-2)

    print("KERNEL_OK")
</pallas_src>

<mosaic_0001>
module attributes {stable_mosaic.version = 11 : i64} {
  func.func @mlp_kernel(%arg0: i32, %arg1: memref<64x32xf32, #tpu.memory_space<vmem>>, %arg2: memref<32x32xbf16, #tpu.memory_space<vmem>>, %arg3: memref<1x32xf32, #tpu.memory_space<vmem>>, %arg4: memref<32x32xbf16, #tpu.memory_space<vmem>>, %arg5: memref<1x32xf32, #tpu.memory_space<vmem>>, %arg6: memref<32x16xbf16, #tpu.memory_space<vmem>>, %arg7: memref<1x16xf32, #tpu.memory_space<vmem>>, %arg8: memref<64x16xf32, #tpu.memory_space<vmem>>) attributes {dimension_semantics = [#tpu.dimension_semantics<parallel>], iteration_bounds = array<i64: 4>, scalar_prefetch = 0 : i64, scratch_operands = 0 : i64, tpu.core_type = #tpu.core_type<tc>, window_params = [{transform_indices = @transform_0, window_bounds = array<i64: 64, 32>}, {pipeline_mode = #tpu.pipeline_mode<synchronous>, transform_indices = @transform_1, window_bounds = array<i64: 32, 32>}, {pipeline_mode = #tpu.pipeline_mode<synchronous>, transform_indices = @transform_2, window_bounds = array<i64: 1, 32>}, {pipeline_mode = #tpu.pipeline_mode<synchronous>, transform_indices = @transform_3, window_bounds = array<i64: 32, 32>}, {pipeline_mode = #tpu.pipeline_mode<synchronous>, transform_indices = @transform_4, window_bounds = array<i64: 1, 32>}, {pipeline_mode = #tpu.pipeline_mode<synchronous>, transform_indices = @transform_5, window_bounds = array<i64: 32, 16>}, {pipeline_mode = #tpu.pipeline_mode<synchronous>, transform_indices = @transform_6, window_bounds = array<i64: 1, 16>}, {transform_indices = @transform_7, window_bounds = array<i64: 64, 16>}]} {
    %c0 = arith.constant 0 : index
    %c0_0 = arith.constant 0 : index
    %0 = vector.load %arg1[%c0, %c0_0] : memref<64x32xf32, #tpu.memory_space<vmem>>, vector<64x32xf32>
    %1 = arith.truncf %0 : vector<64x32xf32> to vector<64x32xbf16>
    %c0_1 = arith.constant 0 : index
    %c0_2 = arith.constant 0 : index
    %2 = vector.load %arg2[%c0_1, %c0_2] : memref<32x32xbf16, #tpu.memory_space<vmem>>, vector<32x32xbf16>
    %cst = arith.constant dense<0.000000e+00> : vector<64x32xf32>
    %3 = tpu.matmul %1, %2, %cst {dimension_numbers = #tpu.dot_dimension_numbers<[1], [0], [0], [1], [0, 0, 1, 1], [], []>} : vector<64x32xbf16>, vector<32x32xbf16>, vector<64x32xf32> -> vector<64x32xf32>
    %c0_3 = arith.constant 0 : index
    %c0_4 = arith.constant 0 : index
    %4 = vector.load %arg3[%c0_3, %c0_4] : memref<1x32xf32, #tpu.memory_space<vmem>>, vector<1x32xf32>
    %5 = vector.broadcast %4 : vector<1x32xf32> to vector<64x32xf32>
    %6 = arith.addf %3, %5 : vector<64x32xf32>
    %cst_5 = arith.constant 0.000000e+00 : f32
    %7 = vector.broadcast %cst_5 : f32 to vector<64x32xf32>
    %8 = arith.maximumf %6, %7 : vector<64x32xf32>
    %9 = arith.truncf %8 : vector<64x32xf32> to vector<64x32xbf16>
    %c0_6 = arith.constant 0 : index
    %c0_7 = arith.constant 0 : index
    %10 = vector.load %arg4[%c0_6, %c0_7] : memref<32x32xbf16, #tpu.memory_space<vmem>>, vector<32x32xbf16>
    %cst_8 = arith.constant dense<0.000000e+00> : vector<64x32xf32>
    %11 = tpu.matmul %9, %10, %cst_8 {dimension_numbers = #tpu.dot_dimension_numbers<[1], [0], [0], [1], [0, 0, 1, 1], [], []>} : vector<64x32xbf16>, vector<32x32xbf16>, vector<64x32xf32> -> vector<64x32xf32>
    %c0_9 = arith.constant 0 : index
    %c0_10 = arith.constant 0 : index
    %12 = vector.load %arg5[%c0_9, %c0_10] : memref<1x32xf32, #tpu.memory_space<vmem>>, vector<1x32xf32>
    %13 = vector.broadcast %12 : vector<1x32xf32> to vector<64x32xf32>
    %14 = arith.addf %11, %13 : vector<64x32xf32>
    %cst_11 = arith.constant 0.000000e+00 : f32
    %15 = vector.broadcast %cst_11 : f32 to vector<64x32xf32>
    %16 = arith.maximumf %14, %15 : vector<64x32xf32>
    %17 = arith.truncf %16 : vector<64x32xf32> to vector<64x32xbf16>
    %c0_12 = arith.constant 0 : index
    %c0_13 = arith.constant 0 : index
    %18 = vector.load %arg6[%c0_12, %c0_13] : memref<32x16xbf16, #tpu.memory_space<vmem>>, vector<32x16xbf16>
    %cst_14 = arith.constant dense<0.000000e+00> : vector<64x16xf32>
    %19 = tpu.matmul %17, %18, %cst_14 {dimension_numbers = #tpu.dot_dimension_numbers<[1], [0], [0], [1], [0, 0, 1, 1], [], []>} : vector<64x32xbf16>, vector<32x16xbf16>, vector<64x16xf32> -> vector<64x16xf32>
    %c0_15 = arith.constant 0 : index
    %c0_16 = arith.constant 0 : index
    %20 = vector.load %arg7[%c0_15, %c0_16] : memref<1x16xf32, #tpu.memory_space<vmem>>, vector<1x16xf32>
    %21 = vector.broadcast %20 : vector<1x16xf32> to vector<64x16xf32>
    %22 = arith.addf %19, %21 : vector<64x16xf32>
    %c0_17 = arith.constant 0 : index
    %c0_18 = arith.constant 0 : index
    %23 = vector.load %arg8[%c0_17, %c0_18] : memref<64x16xf32, #tpu.memory_space<vmem>>, vector<64x16xf32>
    tpu.vector_store %arg8[%c0_17, %c0_18], %22 {strides = array<i32>} : memref<64x16xf32, #tpu.memory_space<vmem>>, vector<64x16xf32>,
    return
  }
  func.func @transform_0(%arg0: i32) -> (i32, i32) {
    %c0_i32 = arith.constant 0 : i32
    %c0_i32_0 = arith.constant 0 : i32
    return %arg0, %c0_i32 : i32, i32
  }
  func.func @transform_1(%arg0: i32) -> (i32, i32) {
    %c0_i32 = arith.constant 0 : i32
    %c0_i32_0 = arith.constant 0 : i32
    %c0_i32_1 = arith.constant 0 : i32
    return %c0_i32, %c0_i32_0 : i32, i32
  }
  func.func @transform_2(%arg0: i32) -> (i32, i32) {
    %c0_i32 = arith.constant 0 : i32
    %c0_i32_0 = arith.constant 0 : i32
    %c0_i32_1 = arith.constant 0 : i32
    return %c0_i32, %c0_i32_0 : i32, i32
  }
  func.func @transform_3(%arg0: i32) -> (i32, i32) {
    %c0_i32 = arith.constant 0 : i32
    %c0_i32_0 = arith.constant 0 : i32
    %c0_i32_1 = arith.constant 0 : i32
    return %c0_i32, %c0_i32_0 : i32, i32
  }
  func.func @transform_4(%arg0: i32) -> (i32, i32) {
    %c0_i32 = arith.constant 0 : i32
    %c0_i32_0 = arith.constant 0 : i32
    %c0_i32_1 = arith.constant 0 : i32
    return %c0_i32, %c0_i32_0 : i32, i32
  }
  func.func @transform_5(%arg0: i32) -> (i32, i32) {
    %c0_i32 = arith.constant 0 : i32
    %c0_i32_0 = arith.constant 0 : i32
    %c0_i32_1 = arith.constant 0 : i32
    return %c0_i32, %c0_i32_0 : i32, i32
  }
  func.func @transform_6(%arg0: i32) -> (i32, i32) {
    %c0_i32 = arith.constant 0 : i32
    %c0_i32_0 = arith.constant 0 : i32
    %c0_i32_1 = arith.constant 0 : i32
    return %c0_i32, %c0_i32_0 : i32, i32
  }
  func.func @transform_7(%arg0: i32) -> (i32, i32) {
    %c0_i32 = arith.constant 0 : i32
    %c0_i32_0 = arith.constant 0 : i32
    return %arg0, %c0_i32 : i32, i32
  }
}

</mosaic_0001>

<llo_original>
// kernel: neural_net_forward.1
$region0: #{neural_net_forward.1}
  #allocation0 [shape = 'u32[]', space=smem, size = 0x4, offset = 0x4, fixed_abs, tag = 'smem constant byte address 0x4 - core index']
  #allocation1 [shape = 'u32[72,128]{1,0:T(1,128)}', space=vmem, size = 0x9000, scoped, tag = 'internal scratch']
  %s0 = inlined_call_operand.vmem [shape: f32[200,32], index: 0, kind: input, shape index: {}]
  %s1 = inlined_call_operand.vmem [shape: bf16[32,32], index: 1, kind: input, shape index: {}]
  %s2 = inlined_call_operand.vmem [shape: f32[1,32], index: 2, kind: input, shape index: {}]
  %s3 = inlined_call_operand.vmem [shape: bf16[32,32], index: 3, kind: input, shape index: {}]
  %s4 = inlined_call_operand.vmem [shape: f32[1,32], index: 4, kind: input, shape index: {}]
  %s5 = inlined_call_operand.vmem [shape: bf16[32,16], index: 5, kind: input, shape index: {}]
  %s6 = inlined_call_operand.vmem [shape: f32[1,16], index: 6, kind: input, shape index: {}]
  %s7 = inlined_call_operand.vmem [shape: f32[200,16], index: 7, kind: output, shape index: {}]
  %s8 = sld [smem:[#allocation0]]
  $region109: #{neural_net_forward.1} parent=0
    _
  %s10 = ssub.s32 1, %s8
  %s11 = scalar_select 0, %s10, %s8
  $region1: #{neural_net_forward.1} parent=0
    #allocation2 [shape = 'u8[65536]{0}', space=vmem, size = 0x10000, scoped, tag = 'output window, operand 0']
    loop: start=0, step=1, limit=6
    $region2: #{neural_net_forward.1} parent=1 // loop_pre_header
      _
    $region3: #{neural_net_forward.1} parent=1 // loop_header
      %s13 = sphi 0, %s17
      %p14 = scmp.ge.s32.totalorder %s13, 6
      %s23 = sphi 0, %s25
      %s26 = sphi 0, %s23
      %s27 = sphi 0, %s26
      %s43 = sphi 0, %s27
      %s47 = sphi 0, %s47
      %s49 = sphi 0, %s47
      %s50 = sphi 0, %s49
      %s64 = sphi 0, %s50
      %s68 = sphi 0, %s68
      %s70 = sphi 0, %s68
      %s71 = sphi 0, %s70
      %s85 = sphi 0, %s71
      %s89 = sphi 0, %s89
      %s91 = sphi 0, %s89
      %s92 = sphi 0, %s91
      %s106 = sphi 0, %s92
      %s110 = sphi 0, %s110
      %s112 = sphi 0, %s110
      %s113 = sphi 0, %s112
      %s127 = sphi 0, %s113
      %s131 = sphi 0, %s131
      %s133 = sphi 0, %s131
      %s134 = sphi 0, %s133
      %s148 = sphi 0, %s134
      %s152 = sphi 0, %s152
      %s154 = sphi 0, %s152
      %s155 = sphi 0, %s154
      %s169 = sphi 0, %s155
      %s175 = sphi 0, %s177
      %s178 = sphi 0, %s175
      %s179 = sphi 0, %s178
      %s195 = sphi 0, %s179
    $region4: #{neural_net_forward.1} parent=1 // loop_header_branch
      %16 = sbr.rel (%p14) target = $region8
    $region5: #{neural_net_forward.1} parent=1 // loop_body
      %s18 = ssub.s32 %s13, 1
      %s19 = ssub.s32 %s13, 2
      %s20 = sadd.s32 %s13, 1
      %s21 = ssub.s32 %s13, %s20
      %p22 = scmp.eq.s32.totalorder %s21, 0
      %s24 = sadd.s32 %s23, 1
      %s25 = scalar_select %p22, %s23, %s24
      %p28 = pneg %p22
      %p29 = scmp.eq.s32.totalorder %s13, 3
      %p30 = por %p28, %p29
      %p31 = scmp.ne.s32.totalorder %s23, %s26
      %p32 = scmp.eq.s32.totalorder %s13, 0
      %p33 = por %p31, %p32
      %p34 = scmp.ne.s32.totalorder %s23, %s26
      %p35 = scmp.eq.s32.totalorder %s18, 3
      %p36 = por %p34, %p35
      %p37 = scmp.ne.s32.totalorder %s26, %s27
      %p38 = scmp.eq.s32.totalorder %s18, 0
      %p39 = por %p37, %p38
      %p40 = scmp.ne.s32.totalorder %s26, %s27
      %p41 = scmp.eq.s32.totalorder %s19, 3
      %p42 = por %p40, %p41
      %p44 = scmp.ne.s32.totalorder %s27, %s43
      %p45 = scmp.eq.s32.totalorder %s19, 0
      %p46 = por %p44, %p45
      %s48 = sadd.s32 %s47, 1
      %p51 = scmp.eq.s32.totalorder %s13, 3
      %p52 = scmp.ne.s32.totalorder %s47, %s49
      %p53 = scmp.eq.s32.totalorder %s13, 0
      %p54 = por %p52, %p53
      %p55 = scmp.ne.s32.totalorder %s47, %s49
      %p56 = scmp.eq.s32.totalorder %s18, 3
      %p57 = por %p55, %p56
      %p58 = scmp.ne.s32.totalorder %s49, %s50
      %p59 = scmp.eq.s32.totalorder %s18, 0
      %p60 = por %p58, %p59
      %p61 = scmp.ne.s32.totalorder %s49, %s50
      %p62 = scmp.eq.s32.totalorder %s19, 3
      %p63 = por %p61, %p62
      %p65 = scmp.ne.s32.totalorder %s50, %s64
      %p66 = scmp.eq.s32.totalorder %s19, 0
      %p67 = por %p65, %p66
      %s69 = sadd.s32 %s68, 1
      %p72 = scmp.eq.s32.totalorder %s13, 3
      %p73 = scmp.ne.s32.totalorder %s68, %s70
      %p74 = scmp.eq.s32.totalorder %s13, 0
      %p75 = por %p73, %p74
      %p76 = scmp.ne.s32.totalorder %s68, %s70
      %p77 = scmp.eq.s32.totalorder %s18, 3
      %p78 = por %p76, %p77
      %p79 = scmp.ne.s32.totalorder %s70, %s71
      %p80 = scmp.eq.s32.totalorder %s18, 0
      %p81 = por %p79, %p80
      %p82 = scmp.ne.s32.totalorder %s70, %s71
      %p83 = scmp.eq.s32.totalorder %s19, 3
      %p84 = por %p82, %p83
      %p86 = scmp.ne.s32.totalorder %s71, %s85
      %p87 = scmp.eq.s32.totalorder %s19, 0
      %p88 = por %p86, %p87
      %s90 = sadd.s32 %s89, 1
      %p93 = scmp.eq.s32.totalorder %s13, 3
      %p94 = scmp.ne.s32.totalorder %s89, %s91
      %p95 = scmp.eq.s32.totalorder %s13, 0
      %p96 = por %p94, %p95
      %p97 = scmp.ne.s32.totalorder %s89, %s91
      %p98 = scmp.eq.s32.totalorder %s18, 3
      %p99 = por %p97, %p98
      %p100 = scmp.ne.s32.totalorder %s91, %s92
      %p101 = scmp.eq.s32.totalorder %s18, 0
      %p102 = por %p100, %p101
      %p103 = scmp.ne.s32.totalorder %s91, %s92
      %p104 = scmp.eq.s32.totalorder %s19, 3
      %p105 = por %p103, %p104
      %p107 = scmp.ne.s32.totalorder %s92, %s106
      %p108 = scmp.eq.s32.totalorder %s19, 0
      %p109 = por %p107, %p108
      %s111 = sadd.s32 %s110, 1
      %p114 = scmp.eq.s32.totalorder %s13, 3
      %p115 = scmp.ne.s32.totalorder %s110, %s112
      %p116 = scmp.eq.s32.totalorder %s13, 0
      %p117 = por %p115, %p116
      %p118 = scmp.ne.s32.totalorder %s110, %s112
      %p119 = scmp.eq.s32.totalorder %s18, 3
      %p120 = por %p118, %p119
      %p121 = scmp.ne.s32.totalorder %s112, %s113
      %p122 = scmp.eq.s32.totalorder %s18, 0
      %p123 = por %p121, %p122
      %p124 = scmp.ne.s32.totalorder %s112, %s113
      %p125 = scmp.eq.s32.totalorder %s19, 3
      %p126 = por %p124, %p125
      %p128 = scmp.ne.s32.totalorder %s113, %s127
      %p129 = scmp.eq.s32.totalorder %s19, 0
      %p130 = por %p128, %p129
      %s132 = sadd.s32 %s131, 1
      %p135 = scmp.eq.s32.totalorder %s13, 3
      %p136 = scmp.ne.s32.totalorder %s131, %s133
      %p137 = scmp.eq.s32.totalorder %s13, 0
      %p138 = por %p136, %p137
      %p139 = scmp.ne.s32.totalorder %s131, %s133
      %p140 = scmp.eq.s32.totalorder %s18, 3
      %p141 = por %p139, %p140
      %p142 = scmp.ne.s32.totalorder %s133, %s134
      %p143 = scmp.eq.s32.totalorder %s18, 0
      %p144 = por %p142, %p143
      %p145 = scmp.ne.s32.totalorder %s133, %s134
      %p146 = scmp.eq.s32.totalorder %s19, 3
      %p147 = por %p145, %p146
      %p149 = scmp.ne.s32.totalorder %s134, %s148
      %p150 = scmp.eq.s32.totalorder %s19, 0
      %p151 = por %p149, %p150
      %s153 = sadd.s32 %s152, 1
      %p156 = scmp.eq.s32.totalorder %s13, 3
      %p157 = scmp.ne.s32.totalorder %s152, %s154
      %p158 = scmp.eq.s32.totalorder %s13, 0
      %p159 = por %p157, %p158
      %p160 = scmp.ne.s32.totalorder %s152, %s154
      %p161 = scmp.eq.s32.totalorder %s18, 3
      %p162 = por %p160, %p161
      %p163 = scmp.ne.s32.totalorder %s154, %s155
      %p164 = scmp.eq.s32.totalorder %s18, 0
      %p165 = por %p163, %p164
      %p166 = scmp.ne.s32.totalorder %s154, %s155
      %p167 = scmp.eq.s32.totalorder %s19, 3
      %p168 = por %p166, %p167
      %p170 = scmp.ne.s32.totalorder %s155, %s169
      %p171 = scmp.eq.s32.totalorder %s19, 0
      %p172 = por %p170, %p171
      %s173 = ssub.s32 %s13, %s20
      %p174 = scmp.eq.s32.totalorder %s173, 0
      %s176 = sadd.s32 %s175, 1
      %s177 = scalar_select %p174, %s175, %s176
      %p180 = pneg %p174
      %p181 = scmp.eq.s32.totalorder %s13, 3
      %p182 = por %p180, %p181
      %p183 = scmp.ne.s32.totalorder %s175, %s178
      %p184 = scmp.eq.s32.totalorder %s13, 0
      %p185 = por %p183, %p184
      %p186 = scmp.ne.s32.totalorder %s175, %s178
      %p187 = scmp.eq.s32.totalorder %s18, 3
      %p188 = por %p186, %p187
      %p189 = scmp.ne.s32.totalorder %s178, %s179
      %p190 = scmp.eq.s32.totalorder %s18, 0
      %p191 = por %p189, %p190
      %p192 = scmp.ne.s32.totalorder %s178, %s179
      %p193 = scmp.eq.s32.totalorder %s19, 3
      %p194 = por %p192, %p193
      %p196 = scmp.ne.s32.totalorder %s179, %s195
      %p197 = scmp.eq.s32.totalorder %s19, 0
      %p198 = por %p196, %p197
      %p199 = scmp.le.s32.totalorder 1, %s13
      %p200 = scmp.lt.s32.totalorder %s13, 5
      %p201 = pnand %p199, %p200
      %p202 = pneg %p201
      // Predicated region
      $region9: #{neural_net_forward.1} parent=5 // pred_check
        _
      $region10: #{neural_net_forward.1} parent=5 // pred_check_branch
        %204 = sbr.rel (%p201) target = $region12
      $region11: #{neural_net_forward.1} parent=5 // pred_region
        %s205 = ssub.s32 %s13, 1
        // Predicated region
        $region13: #{neural_net_forward.1} parent=11 // pred_check
          %p206 = pneg %p60
        $region14: #{neural_net_forward.1} parent=11 // pred_check_branch
          %208 = sbr.rel (%p206) target = $region16
        $region15: #{neural_net_forward.1} parent=11 // pred_region
          _
        $region16: #{neural_net_forward.1} parent=11 // pred_fallthru
          _
        // Predicated region
        $region17: #{neural_net_forward.1} parent=11 // pred_check
          %p209 = pneg %p81
        $region18: #{neural_net_forward.1} parent=11 // pred_check_branch
          %211 = sbr.rel (%p209) target = $region20
        $region19: #{neural_net_forward.1} parent=11 // pred_region
          _
        $region20: #{neural_net_forward.1} parent=11 // pred_fallthru
          _
        // Predicated region
        $region21: #{neural_net_forward.1} parent=11 // pred_check
          %p212 = pneg %p102
        $region22: #{neural_net_forward.1} parent=11 // pred_check_branch
          %214 = sbr.rel (%p212) target = $region24
        $region23: #{neural_net_forward.1} parent=11 // pred_region
          _
        $region24: #{neural_net_forward.1} parent=11 // pred_fallthru
          _
        // Predicated region
        $region25: #{neural_net_forward.1} parent=11 // pred_check
          %p215 = pneg %p123
        $region26: #{neural_net_forward.1} parent=11 // pred_check_branch
          %217 = sbr.rel (%p215) target = $region28
        $region27: #{neural_net_forward.1} parent=11 // pred_region
          _
        $region28: #{neural_net_forward.1} parent=11 // pred_fallthru
          _
        // Predicated region
        $region29: #{neural_net_forward.1} parent=11 // pred_check
          %p218 = pneg %p144
        $region30: #{neural_net_forward.1} parent=11 // pred_check_branch
          %220 = sbr.rel (%p218) target = $region32
        $region31: #{neural_net_forward.1} parent=11 // pred_region
          _
        $region32: #{neural_net_forward.1} parent=11 // pred_fallthru
          _
        // Predicated region
        $region33: #{neural_net_forward.1} parent=11 // pred_check
          %p221 = pneg %p165
        $region34: #{neural_net_forward.1} parent=11 // pred_check_branch
          %223 = sbr.rel (%p221) target = $region36
        $region35: #{neural_net_forward.1} parent=11 // pred_region
          _
        $region36: #{neural_net_forward.1} parent=11 // pred_fallthru
          _
      $region12: #{neural_net_forward.1} parent=5 // pred_fallthru
        _
      %p224 = scmp.lt.s32.totalorder %s13, 4
      // Predicated region
      $region37: #{neural_net_forward.1} parent=5 // pred_check
        %p225 = pneg %p224
      $region38: #{neural_net_forward.1} parent=5 // pred_check_branch
        %227 = sbr.rel (%p225) target = $region40
      $region39: #{neural_net_forward.1} parent=5 // pred_region
        // Predicated region
        $region41: #{neural_net_forward.1} parent=39 // pred_check
          %p228 = pneg %p33
        $region42: #{neural_net_forward.1} parent=39 // pred_check_branch
          %230 = sbr.rel (%p228) target = $region44
        $region43: #{neural_net_forward.1} parent=39 // pred_region
          %s231 = smul.u32 8, %s13
          %s232 = ssub.s32 25, %s231
          %p233 = scmp.lt.s32.totalorder %s232, 8
          %s234 = scalar_select %p233, %s232, 8
          %s235 = smul.u32 8, %s234
          %p236 = scmp.lt.s32.totalorder %s231, 24
          %s237 = scalar_select %p236, %s231, 24
          %s238 = smul.addr %s237, 8
          %s239 = scalar_lea.vmem %s0, %s238
          %s240 = smul.u32 8, %s13
          %s241 = ssub.s32 25, %s240
          %p242 = scmp.lt.s32.totalorder %s241, 8
          %s243 = scalar_select %p242, %s241, 8
          %s244 = smul.u32 8, %s243
        $region44: #{neural_net_forward.1} parent=39 // pred_fallthru
          _
      $region40: #{neural_net_forward.1} parent=5 // pred_fallthru
        _
      %p245 = scmp.le.s32.totalorder 1, %s13
      %p246 = scmp.lt.s32.totalorder %s13, 5
      %p247 = pnand %p245, %p246
      %p248 = pneg %p247
      // Predicated region
      $region45: #{neural_net_forward.1} parent=5 // pred_check
        _
      $region46: #{neural_net_forward.1} parent=5 // pred_check_branch
        %250 = sbr.rel (%p247) target = $region48
      $region47: #{neural_net_forward.1} parent=5 // pred_region
        %s251 = ssub.s32 %s13, 1
        %s252 = smul.u32 8, %s18
        %s253 = ssub.s32 25, %s252
        %p254 = scmp.lt.s32.totalorder %s253, 8
        %s255 = scalar_select %p254, %s253, 8
        %s256 = smul.u32 8, %s255
        %p257 = scmp.lt.s32.totalorder %s252, 24
        %s258 = scalar_select %p257, %s252, 24
        %s259 = smul.addr %s258, 8
        %s260 = scalar_lea.vmem %s0, %s259
        %p261 = pneg %p39
        %p262 = pneg %p36
        %p263 = pneg %p60
        %p264 = pneg %p57
        %p265 = pneg %p81
        %p266 = pneg %p78
        %p267 = pneg %p102
        %p268 = pneg %p99
        %p269 = pneg %p123
        %p270 = pneg %p120
        %p271 = pneg %p144
        %p272 = pneg %p141
        %p273 = pneg %p165
        %p274 = pneg %p162
        %p275 = pneg %p191
        %p276 = pneg %p188
        %s277 = sand.u32 %s178, 1
        %s278 = sand.u32 %s178, 1
        %s279 = smul.addr %s278, 64
        %s280 = scalar_lea.vmem [#allocation2], %s279
        %s281 = smul.u32 8, %s18
        %s282 = ssub.s32 25, %s281
        %p283 = scmp.lt.s32.totalorder %s282, 8
        %s284 = scalar_select %p283, %s282, 8
        %s285 = smul.u32 8, %s284
        %p286 = scmp.lt.s32.totalorder %s281, 24
        %s287 = scalar_select %p286, %s281, 24
        %s288 = smul.addr %s287, 8
        %s289 = scalar_lea.vmem %s0, %s288
        %s290 = smul.u32 8, %s18
        %s291 = ssub.s32 25, %s290
        %p292 = scmp.lt.s32.totalorder %s291, 8
        %s293 = scalar_select %p292, %s291, 8
        %s294 = smul.u32 8, %s293
        %s295 = smul.u32 8, %s18
        %s296 = ssub.s32 25, %s295
        %p297 = scmp.lt.s32.totalorder %s296, 8
        %s298 = scalar_select %p297, %s296, 8
        %s299 = smul.u32 8, %s298
        %v301 = vld [vmem:[%s289] sm:$0xff]
        %v302 = vld [vmem:[%s289 + $0x8] sm:$0xff]
        %v303 = vld [vmem:[%s289 + $0x10] sm:$0xff]
        %v304 = vld [vmem:[%s289 + $0x18] sm:$0xff]
        %v305 = vld [vmem:[%s289 + $0x20] sm:$0xff]
        %v306 = vld [vmem:[%s289 + $0x28] sm:$0xff]
        %v307 = vld [vmem:[%s289 + $0x30] sm:$0xff]
        %v308 = vld [vmem:[%s289 + $0x38] sm:$0xff]
        %v309 = vpack.c.bf16 %v302, %v301
        %v310 = vpack.c.bf16 %v304, %v303
        %v311 = vpack.c.bf16 %v306, %v305
        %v312 = vpack.c.bf16 %v308, %v307
        %v313 = vld [vmem:[%s1] sm:$0xf]
        %v314 = vld [vmem:[%s1 + $0x4] sm:$0xf]
        %v315 = vld [vmem:[%s1 + $0x8] sm:$0xf]
        %v316 = vld [vmem:[%s1 + $0xc] sm:$0xf]
        %v317 = vld [vmem:[%s2] sm:$0x1]
        %v319 = vperm.slane %v317, 0
        %v325 = vunpack.c.l.b16 %v313
        %v326 = vunpack.c.l.b16 %v314
        %v327 = vunpack.c.l.b16 %v315
        %v328 = vunpack.c.l.b16 %v316
        %v329 = vpack.c.b16 %v326, %v325
        %v330 = vpack.c.b16 %v328, %v327
        %vm333 = vcmask 261120
        %v335 = vsel %vm333, %v309, 0
        %v338 = vsel %vm333, %v310, 0
        %v341 = vsel %vm333, %v311, 0
        %v344 = vsel %vm333, %v312, 0
        %346 = vmatpush.bf16.msra.mxu0 0
        %347 = vmatpush.bf16.msra.mxu0 0
        %348 = vmatpush.bf16.msra.mxu0 0
        %349 = vmatpush.bf16.msra.mxu0 0
        %350 = vmatpush.bf16.msra.mxu0 0
        %351 = vmatpush.bf16.msra.mxu0 0
        %352 = vmatpush.bf16.msra.mxu0 %v330
        %353 = vmatpush.bf16.msra.mxu0 %v329
        %354 = vmatmul.bf16.gmra.mxu0 %v335
        %v355 = vpop.f32.mrf.mxu0
        %v356 = vadd.f32 %v319, %v355
        %v357 = vpop.f32.mrf.mxu0
        %v358 = vadd.f32 %v319, %v357
        %359 = vmatmul.bf16.gmra.mxu0 %v338
        %v360 = vpop.f32.mrf.mxu0
        %v361 = vadd.f32 %v319, %v360
        %v362 = vpop.f32.mrf.mxu0
        %v363 = vadd.f32 %v319, %v362
        %364 = vmatmul.bf16.gmra.mxu0 %v341
        %v365 = vpop.f32.mrf.mxu0
        %v366 = vadd.f32 %v319, %v365
        %v367 = vpop.f32.mrf.mxu0
        %v368 = vadd.f32 %v319, %v367
        %369 = vmatmul.bf16.gmra.mxu0 %v344
        %v370 = vpop.f32.mrf.mxu0
        %v371 = vadd.f32 %v319, %v370
        %v372 = vpop.f32.mrf.mxu0
        %v373 = vadd.f32 %v319, %v372
        %374 = vdwg.mxu0
        %v375 = vmax.f32 %v356, 0.0
        %v376 = vmax.f32 %v358, 0.0
        %v377 = vmax.f32 %v361, 0.0
        %v378 = vmax.f32 %v363, 0.0
        %v379 = vmax.f32 %v366, 0.0
        %v380 = vmax.f32 %v368, 0.0
        %v381 = vmax.f32 %v371, 0.0
        %v382 = vmax.f32 %v373, 0.0
        %v383 = vpack.c.bf16 %v376, %v375
        %v384 = vpack.c.bf16 %v378, %v377
        %v385 = vpack.c.bf16 %v380, %v379
        %v386 = vpack.c.bf16 %v382, %v381
        %v387 = vld [vmem:[%s3] sm:$0xf]
        %v388 = vld [vmem:[%s3 + $0x4] sm:$0xf]
        %v389 = vld [vmem:[%s3 + $0x8] sm:$0xf]
        %v390 = vld [vmem:[%s3 + $0xc] sm:$0xf]
        %v391 = vld [vmem:[%s4] sm:$0x1]
        %v393 = vperm.slane %v391, 0
        %v399 = vunpack.c.l.b16 %v387
        %v400 = vunpack.c.l.b16 %v388
        %v401 = vunpack.c.l.b16 %v389
        %v402 = vunpack.c.l.b16 %v390
        %v403 = vpack.c.b16 %v400, %v399
        %v404 = vpack.c.b16 %v402, %v401
        %v408 = vsel %vm333, %v383, 0
        %v411 = vsel %vm333, %v384, 0
        %v414 = vsel %vm333, %v385, 0
        %v417 = vsel %vm333, %v386, 0
        %419 = vmatpush.bf16.msra.mxu0 0
        %420 = vmatpush.bf16.msra.mxu0 0
        %421 = vmatpush.bf16.msra.mxu0 0
        %422 = vmatpush.bf16.msra.mxu0 0
        %423 = vmatpush.bf16.msra.mxu0 0
        %424 = vmatpush.bf16.msra.mxu0 0
        %425 = vmatpush.bf16.msra.mxu0 %v404
        %426 = vmatpush.bf16.msra.mxu0 %v403
        %427 = vmatmul.bf16.gmra.mxu0 %v408
        %v428 = vpop.f32.mrf.mxu0
        %v429 = vadd.f32 %v393, %v428
        %v430 = vpop.f32.mrf.mxu0
        %v431 = vadd.f32 %v393, %v430
        %432 = vmatmul.bf16.gmra.mxu0 %v411
        %v433 = vpop.f32.mrf.mxu0
        %v434 = vadd.f32 %v393, %v433
        %v435 = vpop.f32.mrf.mxu0
        %v436 = vadd.f32 %v393, %v435
        %437 = vmatmul.bf16.gmra.mxu0 %v414
        %v438 = vpop.f32.mrf.mxu0
        %v439 = vadd.f32 %v393, %v438
        %v440 = vpop.f32.mrf.mxu0
        %v441 = vadd.f32 %v393, %v440
        %442 = vmatmul.bf16.gmra.mxu0 %v417
        %v443 = vpop.f32.mrf.mxu0
        %v444 = vadd.f32 %v393, %v443
        %v445 = vpop.f32.mrf.mxu0
        %v446 = vadd.f32 %v393, %v445
        %447 = vdwg.mxu0
        %v448 = vmax.f32 %v429, 0.0
        %v449 = vmax.f32 %v431, 0.0
        %v450 = vmax.f32 %v434, 0.0
        %v451 = vmax.f32 %v436, 0.0
        %v452 = vmax.f32 %v439, 0.0
        %v453 = vmax.f32 %v441, 0.0
        %v454 = vmax.f32 %v444, 0.0
        %v455 = vmax.f32 %v446, 0.0
        %v456 = vpack.c.bf16 %v449, %v448
        %v457 = vpack.c.bf16 %v451, %v450
        %v458 = vpack.c.bf16 %v453, %v452
        %v459 = vpack.c.bf16 %v455, %v454
        %v460 = vld [vmem:[%s5] sm:$0xf]
        %v461 = vld [vmem:[%s5 + $0x4] sm:$0xf]
        %v462 = vld [vmem:[%s5 + $0x8] sm:$0xf]
        %v463 = vld [vmem:[%s5 + $0xc] sm:$0xf]
        %v464 = vld [vmem:[%s6] sm:$0x1]
        %v466 = vperm.slane %v464, 0
        %v472 = vunpack.c.l.b16 %v460
        %v473 = vunpack.c.l.b16 %v461
        %v474 = vunpack.c.l.b16 %v462
        %v475 = vunpack.c.l.b16 %v463
        %v476 = vpack.c.b16 %v473, %v472
        %v477 = vpack.c.b16 %v475, %v474
        %v481 = vsel %vm333, %v456, 0
        %v484 = vsel %vm333, %v457, 0
        %v487 = vsel %vm333, %v458, 0
        %v490 = vsel %vm333, %v459, 0
        %492 = vmatpush.bf16.msra.mxu0 0
        %493 = vmatpush.bf16.msra.mxu0 0
        %494 = vmatpush.bf16.msra.mxu0 0
        %495 = vmatpush.bf16.msra.mxu0 0
        %496 = vmatpush.bf16.msra.mxu0 0
        %497 = vmatpush.bf16.msra.mxu0 0
        %498 = vmatpush.bf16.msra.mxu0 %v477
        %499 = vmatpush.bf16.msra.mxu0 %v476
        %500 = vmatmul.bf16.gmra.mxu0 %v481
        %v501 = vpop.f32.mrf.mxu0
        %v502 = vadd.f32 %v466, %v501
        %v503 = vpop.f32.mrf.mxu0
        %v504 = vadd.f32 %v466, %v503
        %505 = vmatmul.bf16.gmra.mxu0 %v484
        %v506 = vpop.f32.mrf.mxu0
        %v507 = vadd.f32 %v466, %v506
        %v508 = vpop.f32.mrf.mxu0
        %v509 = vadd.f32 %v466, %v508
        %510 = vmatmul.bf16.gmra.mxu0 %v487
        %v511 = vpop.f32.mrf.mxu0
        %v512 = vadd.f32 %v466, %v511
        %v513 = vpop.f32.mrf.mxu0
        %v514 = vadd.f32 %v466, %v513
        %515 = vmatmul.bf16.gmra.mxu0 %v490
        %v516 = vpop.f32.mrf.mxu0
        %v517 = vadd.f32 %v466, %v516
        %v518 = vpop.f32.mrf.mxu0
        %v519 = vadd.f32 %v466, %v518
        %520 = vdwg.mxu0
        %vm521 = vcmask 130048
        %522 = vst.msk [vmem:[%s280] sm:$0xff] %vm521, %v502
        %523 = vst.msk [vmem:[%s280 + $0x8] sm:$0xff] %vm521, %v504
        %524 = vst.msk [vmem:[%s280 + $0x10] sm:$0xff] %vm521, %v507
        %525 = vst.msk [vmem:[%s280 + $0x18] sm:$0xff] %vm521, %v509
        %526 = vst.msk [vmem:[%s280 + $0x20] sm:$0xff] %vm521, %v512
        %527 = vst.msk [vmem:[%s280 + $0x28] sm:$0xff] %vm521, %v514
        %528 = vst.msk [vmem:[%s280 + $0x30] sm:$0xff] %vm521, %v517
        %529 = vst.msk [vmem:[%s280 + $0x38] sm:$0xff] %vm521, %v519
        %s530 = sand.u32 %s178, 1
        %s531 = sand.u32 %s178, 1
        %s532 = smul.addr %s531, 64
        %s533 = scalar_lea.vmem [#allocation2], %s532
        // Predicated region
        $region49: #{neural_net_forward.1} parent=47 // pred_check
          %p534 = pneg %p188
        $region50: #{neural_net_forward.1} parent=47 // pred_check_branch
          %536 = sbr.rel (%p534) target = $region52
        $region51: #{neural_net_forward.1} parent=47 // pred_region
          %s537 = smul.u32 8, %s18
          %s538 = ssub.s32 25, %s537
          %p539 = scmp.lt.s32.totalorder %s538, 8
          %s540 = scalar_select %p539, %s538, 8
          %s541 = smul.u32 8, %s540
          %p542 = scmp.ne.s32.totalorder 0, %s541
          %s543 = smul.addr %s537, 8
          %s544 = scalar_lea.vmem %s7, %s543
          // Predicated region
          $region53: #{neural_net_forward.1} parent=51 // pred_check
            %p545 = pneg %p542
          $region54: #{neural_net_forward.1} parent=51 // pred_check_branch
            %547 = sbr.rel (%p545) target = $region56
          $region55: #{neural_net_forward.1} parent=51 // pred_region
            // Predicated region
            $region57: #{neural_net_forward.1} parent=55 // pred_check
              _
            $region58: #{neural_net_forward.1} parent=55 // pred_check_branch
              %549 = sbr.rel (0) target = $region60
            $region59: #{neural_net_forward.1} parent=55 // pred_region
              // Predicated region
              $region79: #{neural_net_forward.1} parent=59 // pred_check
                _
              $region80: #{neural_net_forward.1} parent=59 // pred_check_branch
                %613 = sbr.rel (0) target = $region82
              $region81: #{neural_net_forward.1} parent=59 // pred_region
                %s614 = sshrl.u32 %s540, 3
                // While loop
                $region83: #{neural_net_forward.1} parent=81 // loop_pre_header
                  _
                $region84: #{neural_net_forward.1} parent=81 // loop_header
                  %s616 = sphi 0, %s618
                  %p617 = scmp.ge.s32.totalorder %s616, %s614
                  %s621 = sphi 0, %s642
                  %s622 = sphi %s533, %s645
                  %s623 = sphi %s544, %s646
                $region85: #{neural_net_forward.1} parent=81 // loop_header_branch
                  %620 = sbr.rel (%p617) target = $region89
                $region86: #{neural_net_forward.1} parent=81 // loop_body
                  %v624 = vld [vmem:[%s622] sm:$0xff]
                  %625 = vst [vmem:[%s623] sm:$0xff] %v624
                  %v626 = vld [vmem:[%s622 + $0x8] sm:$0xff]
                  %627 = vst [vmem:[%s623 + $0x8] sm:$0xff] %v626
                  %v628 = vld [vmem:[%s622 + $0x10] sm:$0xff]
                  %629 = vst [vmem:[%s623 + $0x10] sm:$0xff] %v628
                  %v630 = vld [vmem:[%s622 + $0x18] sm:$0xff]
                  %631 = vst [vmem:[%s623 + $0x18] sm:$0xff] %v630
                  %v632 = vld [vmem:[%s622 + $0x20] sm:$0xff]
                  %633 = vst [vmem:[%s623 + $0x20] sm:$0xff] %v632
                  %v634 = vld [vmem:[%s622 + $0x28] sm:$0xff]
                  %635 = vst [vmem:[%s623 + $0x28] sm:$0xff] %v634
                  %v636 = vld [vmem:[%s622 + $0x30] sm:$0xff]
                  %637 = vst [vmem:[%s623 + $0x30] sm:$0xff] %v636
                  %v638 = vld [vmem:[%s622 + $0x38] sm:$0xff]
                  %639 = vst [vmem:[%s623 + $0x38] sm:$0xff] %v638
                  %s640 = sadd.s32 1, %s621
                  %p641 = scmp.ge.s32.totalorder %s640, %s614
                  %s642 = scalar_select %p641, 0, %s640
                  %s643 = smul.u32 %s642, 64
                  %s644 = smul.u32 %s642, 64
                  %s645 = scalar_lea.vmem %s533, %s643 [#allocation2]
                  %s646 = scalar_lea.vmem %s544, %s644
                $region87: #{neural_net_forward.1} parent=81 // loop_footer
                  %s618 = sadd.s32 %s616, 1
                $region88: #{neural_net_forward.1} parent=81 // loop_footer_branch
                  %615 = sbr.rel target = $region84
                $region89: #{neural_net_forward.1} parent=81 // loop_exit
                  _
                %s647 = sshrl.u32 %s540, 3
                %s648 = sand.u32 %s540, 7
                %s649 = smul.u32 %s647, 8
                %s650 = smul.u32 8, %s649
                %s651 = scalar_lea.vmem %s533, %s650 [#allocation2]
                %s652 = smul.u32 8, %s649
                %s653 = scalar_lea.vmem %s544, %s652
                // While loop
                $region90: #{neural_net_forward.1} parent=81 // loop_pre_header
                  _
                $region91: #{neural_net_forward.1} parent=81 // loop_header
                  %s655 = sphi 0, %s657
                  %p656 = scmp.ge.s32.totalorder %s655, %s648
                  %s660 = sphi 0, %s667
                  %s661 = sphi %s651, %s670
                  %s662 = sphi %s653, %s671
                $region92: #{neural_net_forward.1} parent=81 // loop_header_branch
                  %659 = sbr.rel (%p656) target = $region96
                $region93: #{neural_net_forward.1} parent=81 // loop_body
                  %v663 = vld [vmem:[%s661] sm:$0xff]
                  %664 = vst [vmem:[%s662] sm:$0xff] %v663
                  %s665 = sadd.s32 1, %s660
                  %p666 = scmp.ge.s32.totalorder %s665, %s648
                  %s667 = scalar_select %p666, 0, %s665
                  %s668 = smul.u32 %s667, 8
                  %s669 = smul.u32 %s667, 8
                  %s670 = scalar_lea.vmem %s651, %s668 [#allocation2]
                  %s671 = scalar_lea.vmem %s653, %s669
                $region94: #{neural_net_forward.1} parent=81 // loop_footer
                  %s657 = sadd.s32 %s655, 1
                $region95: #{neural_net_forward.1} parent=81 // loop_footer_branch
                  %654 = sbr.rel target = $region91
                $region96: #{neural_net_forward.1} parent=81 // loop_exit
                  _
              $region82: #{neural_net_forward.1} parent=59 // pred_fallthru
                _
              // Predicated region
              $region97: #{neural_net_forward.1} parent=59 // pred_check
                _
              $region98: #{neural_net_forward.1} parent=59 // pred_check_branch
                %673 = sbr.rel target = $region100
              $region99: #{neural_net_forward.1} parent=59 // pred_region
                _
              $region100: #{neural_net_forward.1} parent=59 // pred_fallthru
                _
            $region60: #{neural_net_forward.1} parent=55 // pred_fallthru
              _
            // Predicated region
            $region61: #{neural_net_forward.1} parent=55 // pred_check
              _
            $region62: #{neural_net_forward.1} parent=55 // pred_check_branch
              %551 = sbr.rel target = $region64
            $region63: #{neural_net_forward.1} parent=55 // pred_region
              %s553 = ssub.s32 256, 1
              %s554 = sshrl.u32 %s540, 3
              // While loop
              $region65: #{neural_net_forward.1} parent=63 // loop_pre_header
                _
              $region66: #{neural_net_forward.1} parent=63 // loop_header
                %s556 = sphi 0, %s558
                %p557 = scmp.ge.s32.totalorder %s556, %s554
                %s561 = sphi 0, %s582
                %s562 = sphi %s533, %s585
                %s563 = sphi %s544, %s586
              $region67: #{neural_net_forward.1} parent=63 // loop_header_branch
                %560 = sbr.rel (%p557) target = $region71
              $region68: #{neural_net_forward.1} parent=63 // loop_body
                %v564 = vld [vmem:[%s562] sm:%s553]
                %565 = vst [vmem:[%s563] sm:%s553] %v564
                %v566 = vld [vmem:[%s562 + $0x8] sm:%s553]
                %567 = vst [vmem:[%s563 + $0x8] sm:%s553] %v566
                %v568 = vld [vmem:[%s562 + $0x10] sm:%s553]
                %569 = vst [vmem:[%s563 + $0x10] sm:%s553] %v568
                %v570 = vld [vmem:[%s562 + $0x18] sm:%s553]
                %571 = vst [vmem:[%s563 + $0x18] sm:%s553] %v570
                %v572 = vld [vmem:[%s562 + $0x20] sm:%s553]
                %573 = vst [vmem:[%s563 + $0x20] sm:%s553] %v572
                %v574 = vld [vmem:[%s562 + $0x28] sm:%s553]
                %575 = vst [vmem:[%s563 + $0x28] sm:%s553] %v574
                %v576 = vld [vmem:[%s562 + $0x30] sm:%s553]
                %577 = vst [vmem:[%s563 + $0x30] sm:%s553] %v576
                %v578 = vld [vmem:[%s562 + $0x38] sm:%s553]
                %579 = vst [vmem:[%s563 + $0x38] sm:%s553] %v578
                %s580 = sadd.s32 1, %s561
                %p581 = scmp.ge.s32.totalorder %s580, %s554
                %s582 = scalar_select %p581, 0, %s580
                %s583 = smul.u32 %s582, 64
                %s584 = smul.u32 %s582, 64
                %s585 = scalar_lea.vmem %s533, %s583 [#allocation2]
                %s586 = scalar_lea.vmem %s544, %s584
              $region69: #{neural_net_forward.1} parent=63 // loop_footer
                %s558 = sadd.s32 %s556, 1
              $region70: #{neural_net_forward.1} parent=63 // loop_footer_branch
                %555 = sbr.rel target = $region66
              $region71: #{neural_net_forward.1} parent=63 // loop_exit
                _
              %s587 = sshrl.u32 %s540, 3
              %s588 = sand.u32 %s540, 7
              %s589 = smul.u32 %s587, 8
              %s590 = smul.u32 8, %s589
              %s591 = scalar_lea.vmem %s533, %s590 [#allocation2]
              %s592 = smul.u32 8, %s589
              %s593 = scalar_lea.vmem %s544, %s592
              // While loop
              $region72: #{neural_net_forward.1} parent=63 // loop_pre_header
                _
              $region73: #{neural_net_forward.1} parent=63 // loop_header
                %s595 = sphi 0, %s597
                %p596 = scmp.ge.s32.totalorder %s595, %s588
                %s600 = sphi 0, %s607
                %s601 = sphi %s591, %s610
                %s602 = sphi %s593, %s611
              $region74: #{neural_net_forward.1} parent=63 // loop_header_branch
                %599 = sbr.rel (%p596) target = $region78
              $region75: #{neural_net_forward.1} parent=63 // loop_body
                %v603 = vld [vmem:[%s601] sm:%s553]
                %604 = vst [vmem:[%s602] sm:%s553] %v603
                %s605 = sadd.s32 1, %s600
                %p606 = scmp.ge.s32.totalorder %s605, %s588
                %s607 = scalar_select %p606, 0, %s605
                %s608 = smul.u32 %s607, 8
                %s609 = smul.u32 %s607, 8
                %s610 = scalar_lea.vmem %s591, %s608 [#allocation2]
                %s611 = scalar_lea.vmem %s593, %s609
              $region76: #{neural_net_forward.1} parent=63 // loop_footer
                %s597 = sadd.s32 %s595, 1
              $region77: #{neural_net_forward.1} parent=63 // loop_footer_branch
                %594 = sbr.rel target = $region73
              $region78: #{neural_net_forward.1} parent=63 // loop_exit
                _
            $region64: #{neural_net_forward.1} parent=55 // pred_fallthru
              _
          $region56: #{neural_net_forward.1} parent=51 // pred_fallthru
            _
          %674 = vnop
        $region52: #{neural_net_forward.1} parent=47 // pred_fallthru
          _
      $region48: #{neural_net_forward.1} parent=5 // pred_fallthru
        _
      %p675 = scmp.le.s32.totalorder 2, %s13
      // Predicated region
      $region101: #{neural_net_forward.1} parent=5 // pred_check
        %p676 = pneg %p675
      $region102: #{neural_net_forward.1} parent=5 // pred_check_branch
        %678 = sbr.rel (%p676) target = $region104
      $region103: #{neural_net_forward.1} parent=5 // pred_region
        %s679 = ssub.s32 %s13, 2
        // Predicated region
        $region105: #{neural_net_forward.1} parent=103 // pred_check
          %p680 = pneg %p194
        $region106: #{neural_net_forward.1} parent=103 // pred_check_branch
          %682 = sbr.rel (%p680) target = $region108
        $region107: #{neural_net_forward.1} parent=103 // pred_region
          %s683 = sand.u32 %s179, 1
          %s684 = sand.u32 %s179, 1
          %s685 = smul.addr %s684, 64
          %s686 = scalar_lea.vmem [#allocation2], %s685
        $region108: #{neural_net_forward.1} parent=103 // pred_fallthru
          _
      $region104: #{neural_net_forward.1} parent=5 // pred_fallthru
        _
    $region6: #{neural_net_forward.1} parent=1 // loop_footer
      %s17 = sadd.s32 1, %s13
    $region7: #{neural_net_forward.1} parent=1 // loop_footer_branch
      %12 = sbr.rel target = $region3
    $region8: #{neural_net_forward.1} parent=1 // loop_exit
      _

</llo_original>
